<compile_context>
chip_gen: v6e
topology: v6e:2x2x1
jax: 0.10.0
libtpu: 0.0.40
codegen_flags: <defaults>
</compile_context>

<pallas_src>
import jax
import jax.numpy as jnp
from jax.experimental import pallas as pl
from jax.experimental.pallas import tpu as pltpu

_PAD = 128        # lane-dense width every layer is zero-padded to
_N_LAYERS = 8     # 4 layers in block1 + 4 layers in block2


def _round_up(x, m):
    return (x + m - 1) // m * m


def _cdiv(a, b):
    return -(-a // b)


def _bf16_epilogue_ok():
    """Use a bf16 bias-add/ReLU epilogue only where the VPU has bf16 (v6e/v7x)."""
    try:
        kind = jax.devices()[0].device_kind.lower()
    except Exception:
        return False
    return ("v6" in kind) or ("v7" in kind)


def _make_kernel(in_dim, compute_dtype):
    """in_dim: real (sublane-rounded) input feature width; compute_dtype:
    dtype for the bias-add/ReLU epilogue and inter-layer activations."""

    def kernel(x_ref, w_ref, b_ref, o_ref):
        # x_ref: (tile_b, in_dim) bf16
        # w_ref: (8, 128, 128)    bf16   zero-padded, (in, out) layout
        # b_ref: (8, 128)         compute_dtype, zero-padded
        # o_ref: (tile_b, 128)    f32

        def layer(h, i, k=_PAD):
            w = w_ref[i] if k == _PAD else w_ref[i, :k, :]
            y = jnp.dot(h.astype(jnp.bfloat16), w,
                        preferred_element_type=jnp.float32)   # MXU, f32 acc
            y = y.astype(compute_dtype) + b_ref[i:i + 1, :]    # VPU bias add
            return jnp.maximum(y, 0).astype(compute_dtype)     # VPU ReLU

        # block1: layer 0 contracts only over the real in_dim rows (the rest
        # of the weight tile is zero), so x never needs lane padding.
        h = layer(x_ref[...], 0, k=in_dim)
        for i in range(1, 4):
            h = layer(h, i)
        feat1 = h

        # block2
        for i in range(4, 8):
            h = layer(h, i)

        # residual add in f32; lane-dense f32 store (unmasked vst)
        o_ref[...] = feat1.astype(jnp.float32) + h.astype(jnp.float32)

    return kernel


def mlp_extractor(x, w_slab, b_slab, feat_dim, *, max_tile_b=4096):
    """x: (B, input_dim) f32.  w_slab: (8, 128, 128) bf16 zero-padded (in, out).
    b_slab: (8, 128) f32 zero-padded.  Returns (B, feat_dim) f32."""
    B, in_dim = x.shape
    D = w_slab.shape[-1]
    assert w_slab.shape == (_N_LAYERS, _PAD, _PAD)
    assert b_slab.shape == (_N_LAYERS, _PAD)
    assert in_dim <= _PAD and feat_dim <= _PAD, "dims must be <= 128"

    # ---- batch tiling: big tiles (amortize ~0.35us/step), minimal padding,
    # and >= 2 grid steps when the batch allows it (v7x megacore). ----
    n_steps = max(1, _cdiv(B, max_tile_b))
    if B > 8 and n_steps < 2:
        n_steps = 2
    tile_b = _round_up(_cdiv(B, n_steps), 8)
    pad_b = tile_b * n_steps

    # ---- input: bf16, real feature width (rounded up to a sublane multiple);
    # pad only when actually needed. ----
    pad_in = _round_up(in_dim, 8)
    xb = x.astype(jnp.bfloat16)
    if pad_b != B or pad_in != in_dim:
        xb = jnp.zeros((pad_b, pad_in), jnp.bfloat16).at[:B, :in_dim].set(xb)

    compute_dtype = jnp.bfloat16 if _bf16_epilogue_ok() else jnp.float32
    b_slab = b_slab.astype(compute_dtype)

    kernel = _make_kernel(pad_in, compute_dtype)

    out = pl.pallas_call(
        kernel,
        out_shape=jax.ShapeDtypeStruct((pad_b, D), jnp.float32),
        grid=(n_steps,),
        in_specs=[
            pl.BlockSpec((tile_b, pad_in), lambda i: (i, 0)),   # x tile
            pl.BlockSpec(w_slab.shape, lambda i: (0, 0, 0)),    # resident weights
            pl.BlockSpec(b_slab.shape, lambda i: (0, 0)),       # resident biases
        ],
        out_specs=pl.BlockSpec((tile_b, D), lambda i: (i, 0)),
        compiler_params=pltpu.CompilerParams(
            dimension_semantics=("parallel",)),
    )(xb, w_slab, b_slab)

    return out[:B, :feat_dim]


def init_params(key, input_dim, hidden_dim, feat_dim):
    """Deterministic init mimicking nn.Linear default
    (uniform(-1/sqrt(fan_in), 1/sqrt(fan_in))).  Weights returned as (in, out)."""
    dims1 = [(input_dim, hidden_dim), (hidden_dim, hidden_dim),
             (hidden_dim, hidden_dim), (hidden_dim, feat_dim)]
    dims2 = [(feat_dim, hidden_dim), (hidden_dim, hidden_dim),
             (hidden_dim, hidden_dim), (hidden_dim, feat_dim)]
    ws, bs = [], []
    for (fin, fout) in dims1 + dims2:
        key, kw, kb = jax.random.split(key, 3)
        bound = 1.0 / jnp.sqrt(fin)
        ws.append(jax.random.uniform(kw, (fin, fout), jnp.float32, -bound, bound))
        bs.append(jax.random.uniform(kb, (fout,), jnp.float32, -bound, bound))
    return ws, bs


def pack_params(ws, bs, pad=_PAD):
    """Pack 8 (in, out) weights / (out,) biases into zero-padded slabs."""
    for w in ws:
        assert w.shape[0] <= pad and w.shape[1] <= pad, "dims must be <= 128"
    w_slab = jnp.stack([
        jnp.zeros((pad, pad), jnp.float32).at[:w.shape[0], :w.shape[1]].set(w)
        for w in ws
    ]).astype(jnp.bfloat16)
    b_slab = jnp.stack([
        jnp.zeros((pad,), jnp.float32).at[:b.shape[0]].set(b)
        for b in bs
    ])
    return w_slab, b_slab


def reference(x, ws, bs):
    """Pure-JAX f32 reference of the same forward pass."""
    def block(h, w_list, b_list):
        for w, b in zip(w_list, b_list):
            h = jnp.maximum(h @ w + b, 0.0)
        return h
    feat1 = block(x, ws[:4], bs[:4])
    return feat1 + block(feat1, ws[4:], bs[4:])


if __name__ == "__main__":
    key = jax.random.PRNGKey(0)
    k_x, k_p, k_x2 = jax.random.split(key, 3)

    batch, input_dim, hidden_dim, feat_dim = 8, 16, 32, 32
    ws, bs = init_params(k_p, input_dim, hidden_dim, feat_dim)
    w_slab, b_slab = pack_params(ws, bs)

    # Small single-tile case.
    x = jax.random.normal(k_x, (batch, input_dim), jnp.float32)
    out = jax.block_until_ready(mlp_extractor(x, w_slab, b_slab, feat_dim))
    ref = reference(x, ws, bs)
    assert out.shape == (batch, feat_dim)
    # bf16 matmul operands (and bf16 epilogue on v6e/v7x) -> loose tolerance.
    assert jnp.allclose(out, ref, atol=5e-2, rtol=5e-2), \
        float(jnp.max(jnp.abs(out - ref)))

    # Multi-step grid case (exercises batch tiling / padding path).
    x2 = jax.random.normal(k_x2, (300, input_dim), jnp.float32)
    out2 = jax.block_until_ready(mlp_extractor(x2, w_slab, b_slab, feat_dim))
    ref2 = reference(x2, ws, bs)
    assert out2.shape == (300, feat_dim)
    assert jnp.allclose(out2, ref2, atol=5e-2, rtol=5e-2), \
        float(jnp.max(jnp.abs(out2 - ref2)))

    print("KERNEL_OK")
</pallas_src>

<mosaic_0001>
module attributes {stable_mosaic.version = 11 : i64} {
  func.func @kernel(%arg0: i32, %arg1: memref<8x16xbf16, #tpu.memory_space<vmem>>, %arg2: memref<8x128x128xbf16, #tpu.memory_space<vmem>>, %arg3: memref<8x128xf32, #tpu.memory_space<vmem>>, %arg4: memref<8x128xf32, #tpu.memory_space<vmem>>) attributes {dimension_semantics = [#tpu.dimension_semantics<parallel>], iteration_bounds = array<i64: 1>, scalar_prefetch = 0 : i64, scratch_operands = 0 : i64, tpu.core_type = #tpu.core_type<tc>, window_params = [{transform_indices = @transform_0, window_bounds = array<i64: 8, 16>}, {pipeline_mode = #tpu.pipeline_mode<synchronous>, transform_indices = @transform_1, window_bounds = array<i64: 8, 128, 128>}, {pipeline_mode = #tpu.pipeline_mode<synchronous>, transform_indices = @transform_2, window_bounds = array<i64: 8, 128>}, {transform_indices = @transform_3, window_bounds = array<i64: 8, 128>}]} {
    %c0 = arith.constant 0 : index
    %c0_0 = arith.constant 0 : index
    %0 = vector.load %arg1[%c0, %c0_0] : memref<8x16xbf16, #tpu.memory_space<vmem>>, vector<8x16xbf16>
    %c0_1 = arith.constant 0 : index
    %c0_2 = arith.constant 0 : index
    %c0_3 = arith.constant 0 : index
    %1 = vector.load %arg2[%c0_1, %c0_2, %c0_3] : memref<8x128x128xbf16, #tpu.memory_space<vmem>>, vector<1x16x128xbf16>
    %2 = vector.shape_cast %1 : vector<1x16x128xbf16> to vector<16x128xbf16>
    %cst = arith.constant dense<0.000000e+00> : vector<8x128xf32>
    %3 = tpu.matmul %0, %2, %cst {dimension_numbers = #tpu.dot_dimension_numbers<[1], [0], [0], [1], [0, 0, 1, 1], [], []>} : vector<8x16xbf16>, vector<16x128xbf16>, vector<8x128xf32> -> vector<8x128xf32>
    %c0_4 = arith.constant 0 : index
    %c0_5 = arith.constant 0 : index
    %4 = vector.load %arg3[%c0_4, %c0_5] : memref<8x128xf32, #tpu.memory_space<vmem>>, vector<1x128xf32>
    %5 = vector.broadcast %4 : vector<1x128xf32> to vector<8x128xf32>
    %6 = arith.addf %3, %5 : vector<8x128xf32>
    %cst_6 = arith.constant 0.000000e+00 : f32
    %7 = vector.broadcast %cst_6 : f32 to vector<8x128xf32>
    %8 = arith.maximumf %6, %7 : vector<8x128xf32>
    %c1 = arith.constant 1 : index
    %c0_7 = arith.constant 0 : index
    %c0_8 = arith.constant 0 : index
    %9 = vector.load %arg2[%c1, %c0_7, %c0_8] : memref<8x128x128xbf16, #tpu.memory_space<vmem>>, vector<1x128x128xbf16>
    %10 = vector.shape_cast %9 : vector<1x128x128xbf16> to vector<128x128xbf16>
    %11 = arith.truncf %8 : vector<8x128xf32> to vector<8x128xbf16>
    %cst_9 = arith.constant dense<0.000000e+00> : vector<8x128xf32>
    %12 = tpu.matmul %11, %10, %cst_9 {dimension_numbers = #tpu.dot_dimension_numbers<[1], [0], [0], [1], [0, 0, 1, 1], [], []>} : vector<8x128xbf16>, vector<128x128xbf16>, vector<8x128xf32> -> vector<8x128xf32>
    %c1_10 = arith.constant 1 : index
    %c0_11 = arith.constant 0 : index
    %13 = vector.load %arg3[%c1_10, %c0_11] : memref<8x128xf32, #tpu.memory_space<vmem>>, vector<1x128xf32>
    %14 = vector.broadcast %13 : vector<1x128xf32> to vector<8x128xf32>
    %15 = arith.addf %12, %14 : vector<8x128xf32>
    %cst_12 = arith.constant 0.000000e+00 : f32
    %16 = vector.broadcast %cst_12 : f32 to vector<8x128xf32>
    %17 = arith.maximumf %15, %16 : vector<8x128xf32>
    %c2 = arith.constant 2 : index
    %c0_13 = arith.constant 0 : index
    %c0_14 = arith.constant 0 : index
    %18 = vector.load %arg2[%c2, %c0_13, %c0_14] : memref<8x128x128xbf16, #tpu.memory_space<vmem>>, vector<1x128x128xbf16>
    %19 = vector.shape_cast %18 : vector<1x128x128xbf16> to vector<128x128xbf16>
    %20 = arith.truncf %17 : vector<8x128xf32> to vector<8x128xbf16>
    %cst_15 = arith.constant dense<0.000000e+00> : vector<8x128xf32>
    %21 = tpu.matmul %20, %19, %cst_15 {dimension_numbers = #tpu.dot_dimension_numbers<[1], [0], [0], [1], [0, 0, 1, 1], [], []>} : vector<8x128xbf16>, vector<128x128xbf16>, vector<8x128xf32> -> vector<8x128xf32>
    %c2_16 = arith.constant 2 : index
    %c0_17 = arith.constant 0 : index
    %22 = vector.load %arg3[%c2_16, %c0_17] : memref<8x128xf32, #tpu.memory_space<vmem>>, vector<1x128xf32>
    %23 = vector.broadcast %22 : vector<1x128xf32> to vector<8x128xf32>
    %24 = arith.addf %21, %23 : vector<8x128xf32>
    %cst_18 = arith.constant 0.000000e+00 : f32
    %25 = vector.broadcast %cst_18 : f32 to vector<8x128xf32>
    %26 = arith.maximumf %24, %25 : vector<8x128xf32>
    %c3 = arith.constant 3 : index
    %c0_19 = arith.constant 0 : index
    %c0_20 = arith.constant 0 : index
    %27 = vector.load %arg2[%c3, %c0_19, %c0_20] : memref<8x128x128xbf16, #tpu.memory_space<vmem>>, vector<1x128x128xbf16>
    %28 = vector.shape_cast %27 : vector<1x128x128xbf16> to vector<128x128xbf16>
    %29 = arith.truncf %26 : vector<8x128xf32> to vector<8x128xbf16>
    %cst_21 = arith.constant dense<0.000000e+00> : vector<8x128xf32>
    %30 = tpu.matmul %29, %28, %cst_21 {dimension_numbers = #tpu.dot_dimension_numbers<[1], [0], [0], [1], [0, 0, 1, 1], [], []>} : vector<8x128xbf16>, vector<128x128xbf16>, vector<8x128xf32> -> vector<8x128xf32>
    %c3_22 = arith.constant 3 : index
    %c0_23 = arith.constant 0 : index
    %31 = vector.load %arg3[%c3_22, %c0_23] : memref<8x128xf32, #tpu.memory_space<vmem>>, vector<1x128xf32>
    %32 = vector.broadcast %31 : vector<1x128xf32> to vector<8x128xf32>
    %33 = arith.addf %30, %32 : vector<8x128xf32>
    %cst_24 = arith.constant 0.000000e+00 : f32
    %34 = vector.broadcast %cst_24 : f32 to vector<8x128xf32>
    %35 = arith.maximumf %33, %34 : vector<8x128xf32>
    %c4 = arith.constant 4 : index
    %c0_25 = arith.constant 0 : index
    %c0_26 = arith.constant 0 : index
    %36 = vector.load %arg2[%c4, %c0_25, %c0_26] : memref<8x128x128xbf16, #tpu.memory_space<vmem>>, vector<1x128x128xbf16>
    %37 = vector.shape_cast %36 : vector<1x128x128xbf16> to vector<128x128xbf16>
    %38 = arith.truncf %35 : vector<8x128xf32> to vector<8x128xbf16>
    %cst_27 = arith.constant dense<0.000000e+00> : vector<8x128xf32>
    %39 = tpu.matmul %38, %37, %cst_27 {dimension_numbers = #tpu.dot_dimension_numbers<[1], [0], [0], [1], [0, 0, 1, 1], [], []>} : vector<8x128xbf16>, vector<128x128xbf16>, vector<8x128xf32> -> vector<8x128xf32>
    %c4_28 = arith.constant 4 : index
    %c0_29 = arith.constant 0 : index
    %40 = vector.load %arg3[%c4_28, %c0_29] : memref<8x128xf32, #tpu.memory_space<vmem>>, vector<1x128xf32>
    %41 = vector.broadcast %40 : vector<1x128xf32> to vector<8x128xf32>
    %42 = arith.addf %39, %41 : vector<8x128xf32>
    %cst_30 = arith.constant 0.000000e+00 : f32
    %43 = vector.broadcast %cst_30 : f32 to vector<8x128xf32>
    %44 = arith.maximumf %42, %43 : vector<8x128xf32>
    %c5 = arith.constant 5 : index
    %c0_31 = arith.constant 0 : index
    %c0_32 = arith.constant 0 : index
    %45 = vector.load %arg2[%c5, %c0_31, %c0_32] : memref<8x128x128xbf16, #tpu.memory_space<vmem>>, vector<1x128x128xbf16>
    %46 = vector.shape_cast %45 : vector<1x128x128xbf16> to vector<128x128xbf16>
    %47 = arith.truncf %44 : vector<8x128xf32> to vector<8x128xbf16>
    %cst_33 = arith.constant dense<0.000000e+00> : vector<8x128xf32>
    %48 = tpu.matmul %47, %46, %cst_33 {dimension_numbers = #tpu.dot_dimension_numbers<[1], [0], [0], [1], [0, 0, 1, 1], [], []>} : vector<8x128xbf16>, vector<128x128xbf16>, vector<8x128xf32> -> vector<8x128xf32>
    %c5_34 = arith.constant 5 : index
    %c0_35 = arith.constant 0 : index
    %49 = vector.load %arg3[%c5_34, %c0_35] : memref<8x128xf32, #tpu.memory_space<vmem>>, vector<1x128xf32>
    %50 = vector.broadcast %49 : vector<1x128xf32> to vector<8x128xf32>
    %51 = arith.addf %48, %50 : vector<8x128xf32>
    %cst_36 = arith.constant 0.000000e+00 : f32
    %52 = vector.broadcast %cst_36 : f32 to vector<8x128xf32>
    %53 = arith.maximumf %51, %52 : vector<8x128xf32>
    %c6 = arith.constant 6 : index
    %c0_37 = arith.constant 0 : index
    %c0_38 = arith.constant 0 : index
    %54 = vector.load %arg2[%c6, %c0_37, %c0_38] : memref<8x128x128xbf16, #tpu.memory_space<vmem>>, vector<1x128x128xbf16>
    %55 = vector.shape_cast %54 : vector<1x128x128xbf16> to vector<128x128xbf16>
    %56 = arith.truncf %53 : vector<8x128xf32> to vector<8x128xbf16>
    %cst_39 = arith.constant dense<0.000000e+00> : vector<8x128xf32>
    %57 = tpu.matmul %56, %55, %cst_39 {dimension_numbers = #tpu.dot_dimension_numbers<[1], [0], [0], [1], [0, 0, 1, 1], [], []>} : vector<8x128xbf16>, vector<128x128xbf16>, vector<8x128xf32> -> vector<8x128xf32>
    %c6_40 = arith.constant 6 : index
    %c0_41 = arith.constant 0 : index
    %58 = vector.load %arg3[%c6_40, %c0_41] : memref<8x128xf32, #tpu.memory_space<vmem>>, vector<1x128xf32>
    %59 = vector.broadcast %58 : vector<1x128xf32> to vector<8x128xf32>
    %60 = arith.addf %57, %59 : vector<8x128xf32>
    %cst_42 = arith.constant 0.000000e+00 : f32
    %61 = vector.broadcast %cst_42 : f32 to vector<8x128xf32>
    %62 = arith.maximumf %60, %61 : vector<8x128xf32>
    %c7 = arith.constant 7 : index
    %c0_43 = arith.constant 0 : index
    %c0_44 = arith.constant 0 : index
    %63 = vector.load %arg2[%c7, %c0_43, %c0_44] : memref<8x128x128xbf16, #tpu.memory_space<vmem>>, vector<1x128x128xbf16>
    %64 = vector.shape_cast %63 : vector<1x128x128xbf16> to vector<128x128xbf16>
    %65 = arith.truncf %62 : vector<8x128xf32> to vector<8x128xbf16>
    %cst_45 = arith.constant dense<0.000000e+00> : vector<8x128xf32>
    %66 = tpu.matmul %65, %64, %cst_45 {dimension_numbers = #tpu.dot_dimension_numbers<[1], [0], [0], [1], [0, 0, 1, 1], [], []>} : vector<8x128xbf16>, vector<128x128xbf16>, vector<8x128xf32> -> vector<8x128xf32>
    %c7_46 = arith.constant 7 : index
    %c0_47 = arith.constant 0 : index
    %67 = vector.load %arg3[%c7_46, %c0_47] : memref<8x128xf32, #tpu.memory_space<vmem>>, vector<1x128xf32>
    %68 = vector.broadcast %67 : vector<1x128xf32> to vector<8x128xf32>
    %69 = arith.addf %66, %68 : vector<8x128xf32>
    %cst_48 = arith.constant 0.000000e+00 : f32
    %70 = vector.broadcast %cst_48 : f32 to vector<8x128xf32>
    %71 = arith.maximumf %69, %70 : vector<8x128xf32>
    %72 = arith.addf %35, %71 : vector<8x128xf32>
    %c0_49 = arith.constant 0 : index
    %c0_50 = arith.constant 0 : index
    %73 = vector.load %arg4[%c0_49, %c0_50] : memref<8x128xf32, #tpu.memory_space<vmem>>, vector<8x128xf32>
    tpu.vector_store %arg4[%c0_49, %c0_50], %72 {strides = array<i32>} : memref<8x128xf32, #tpu.memory_space<vmem>>, vector<8x128xf32>,
    return
  }
  func.func @transform_0(%arg0: i32) -> (i32, i32) {
    %c0_i32 = arith.constant 0 : i32
    %c0_i32_0 = arith.constant 0 : i32
    return %arg0, %c0_i32 : i32, i32
  }
  func.func @transform_1(%arg0: i32) -> (i32, i32, i32) {
    %c0_i32 = arith.constant 0 : i32
    %c0_i32_0 = arith.constant 0 : i32
    %c0_i32_1 = arith.constant 0 : i32
    %c0_i32_2 = arith.constant 0 : i32
    return %c0_i32, %c0_i32_0, %c0_i32_1 : i32, i32, i32
  }
  func.func @transform_2(%arg0: i32) -> (i32, i32) {
    %c0_i32 = arith.constant 0 : i32
    %c0_i32_0 = arith.constant 0 : i32
    %c0_i32_1 = arith.constant 0 : i32
    return %c0_i32, %c0_i32_0 : i32, i32
  }
  func.func @transform_3(%arg0: i32) -> (i32, i32) {
    %c0_i32 = arith.constant 0 : i32
    %c0_i32_0 = arith.constant 0 : i32
    return %arg0, %c0_i32 : i32, i32
  }
}

</mosaic_0001>

<llo_original>
// kernel: tpu_custom_call.1
$region0: #{tpu_custom_call.1}
  #allocation0 [shape = 'u32[]', space=smem, size = 0x4, offset = 0x4, fixed_abs, tag = 'smem constant byte address 0x4 - core index']
  #allocation1 [shape = 'u32[144,128]{1,0:T(1,128)}', space=vmem, size = 0x12000, scoped, tag = 'internal scratch']
  %s0 = inlined_call_operand.hbm [shape: bf16[8,16], index: 0, kind: input, shape index: {}]
  %s1 = inlined_call_operand.hbm [shape: bf16[8,128,128], index: 1, kind: input, shape index: {}]
  %s2 = inlined_call_operand.hbm [shape: f32[8,128], index: 2, kind: input, shape index: {}]
  %s3 = inlined_call_operand.hbm [shape: f32[8,128], index: 3, kind: output, shape index: {}]
  %s4 = sld [smem:[#allocation0]]
  $region34: #{tpu_custom_call.1} parent=0
    _
  %s6 = ssub.s32 1, %s4
  %s7 = scalar_select 0, %s6, %s4
  $region1: #{tpu_custom_call.1} parent=0
    #allocation2 [shape = 'u8[2048]{0}', space=vmem, size = 0x800, scoped, tag = 'input window, operand 0, single buffered']
    #allocation3 [shape = 's32[1]{0}', space=sflag, size = 0x4, scoped, tag = 'scoped memory for tpu_custom_call.1']
    #allocation4 [shape = 's32[1]{0}', space=sflag, size = 0x4, scoped, tag = 'scoped memory for tpu_custom_call.1']
    #allocation5 [shape = 'u8[262144]{0}', space=vmem, size = 0x40000, scoped, tag = 'input window, operand 1, single buffered']
    #allocation6 [shape = 's32[1]{0}', space=sflag, size = 0x4, scoped, tag = 'scoped memory for tpu_custom_call.1']
    #allocation7 [shape = 'u8[4096]{0}', space=vmem, size = 0x1000, scoped, tag = 'input window, operand 2, single buffered']
    #allocation8 [shape = 'u8[4096]{0}', space=vmem, size = 0x1000, scoped, tag = 'output window, operand 0, single buffered']
    %8 = vsyncpa [#allocation3], 0
    %9 = vsyncpa [#allocation6], 0
    %10 = vsyncpa [#allocation4], 0
    // Predicated region
    $region2: #{tpu_custom_call.1} parent=1 // pred_check
      _
    $region3: #{tpu_custom_call.1} parent=1 // pred_check_branch
      %12 = sbr.rel (0) target = $region5
    $region4: #{tpu_custom_call.1} parent=1 // pred_region
      %s14 = ssub.s32 64, 64
      %15 = vsyncadd [#allocation3], %s14
      %s17 = sshll.u32 [#allocation2], 4
      %s18 = int_to_ptr.vmem [resolvable:$true] %s17
      %20 = dma.hbm_to_vmem [thread:$0]  %s0, 64, %s18, [#allocation3]
    $region5: #{tpu_custom_call.1} parent=1 // pred_fallthru
      _
    // Predicated region
    $region6: #{tpu_custom_call.1} parent=1 // pred_check
      _
    $region7: #{tpu_custom_call.1} parent=1 // pred_check_branch
      %22 = sbr.rel (0) target = $region9
    $region8: #{tpu_custom_call.1} parent=1 // pred_region
      %s24 = ssub.s32 8192, 8192
      %25 = vsyncadd [#allocation6], %s24
      %s26 = sshll.u32 [#allocation5], 4
      %s27 = int_to_ptr.vmem [resolvable:$true] %s26
      %32 = dma.hbm_to_vmem [thread:$0]  %s1, 8192, %s27, [#allocation6], 64, 64, 4
    $region9: #{tpu_custom_call.1} parent=1 // pred_fallthru
      _
    // Predicated region
    $region10: #{tpu_custom_call.1} parent=1 // pred_check
      _
    $region11: #{tpu_custom_call.1} parent=1 // pred_check_branch
      %34 = sbr.rel (0) target = $region13
    $region12: #{tpu_custom_call.1} parent=1 // pred_region
      %s36 = ssub.s32 128, 128
      %37 = vsyncadd [#allocation6], %s36
      %s39 = sshll.u32 [#allocation7], 4
      %s40 = int_to_ptr.vmem [resolvable:$true] %s39
      %42 = dma.hbm_to_vmem [thread:$0]  %s2, 128, %s40, [#allocation6]
    $region13: #{tpu_custom_call.1} parent=1 // pred_fallthru
      _
    // Predicated region
    $region14: #{tpu_custom_call.1} parent=1 // pred_check
      _
    $region15: #{tpu_custom_call.1} parent=1 // pred_check_branch
      %44 = sbr.rel (0) target = $region17
    $region16: #{tpu_custom_call.1} parent=1 // pred_region
      %45 = dma.done [#allocation3], 64
    $region17: #{tpu_custom_call.1} parent=1 // pred_fallthru
      _
    // Predicated region
    $region18: #{tpu_custom_call.1} parent=1 // pred_check
      _
    $region19: #{tpu_custom_call.1} parent=1 // pred_check_branch
      %47 = sbr.rel (0) target = $region21
    $region20: #{tpu_custom_call.1} parent=1 // pred_region
      %48 = dma.done [#allocation6], 8192
    $region21: #{tpu_custom_call.1} parent=1 // pred_fallthru
      _
    // Predicated region
    $region22: #{tpu_custom_call.1} parent=1 // pred_check
      _
    $region23: #{tpu_custom_call.1} parent=1 // pred_check_branch
      %50 = sbr.rel (0) target = $region25
    $region24: #{tpu_custom_call.1} parent=1 // pred_region
      %51 = dma.done [#allocation6], 128
    $region25: #{tpu_custom_call.1} parent=1 // pred_fallthru
      _
    %v53 = vld [vmem:[#allocation2] sm:$0xf]
    %v54 = vld [vmem:[#allocation5] sm:$0xf]
    %v55 = vld [vmem:[#allocation5 + $0x4] sm:$0xf]
    %v56 = vld [vmem:[#allocation7] sm:$0x1]
    %v57 = vlaneseq
    %v58 = vshrl.u32 %v57, 7
    %v59 = vsub.s32 0, %v58
    %v60 = vrot.slane %v56, %v59
    %v63 = vunpack.c.l.b16 %v54
    %v64 = vunpack.c.l.b16 %v55
    %v65 = vpack.c.b16 %v64, %v63
    %vm67 = vcmask 130048
    %v69 = vsel %vm67, %v53, 0
    %71 = vmatprep.subr.bf16.mxu0 0
    %72 = vmatpush1.bf16.msra.mxu0 0
    %73 = vmatprep.subr.bf16.mxu0 0
    %74 = vmatpush1.bf16.msra.mxu0 0
    %75 = vmatprep.subr.bf16.mxu0 0
    %76 = vmatpush1.bf16.msra.mxu0 0
    %77 = vmatprep.subr.bf16.mxu0 0
    %78 = vmatpush1.bf16.msra.mxu0 0
    %79 = vmatprep.subr.bf16.mxu0 0
    %80 = vmatpush1.bf16.msra.mxu0 0
    %81 = vmatprep.subr.bf16.mxu0 0
    %82 = vmatpush1.bf16.msra.mxu0 0
    %83 = vmatprep.subr.bf16.mxu0 0
    %84 = vmatpush1.bf16.msra.mxu0 0
    %85 = vmatprep.subr.bf16.mxu0 0
    %86 = vmatpush1.bf16.msra.mxu0 %v65
    %87 = vmatprep.subr.bf16.mxu0 0
    %88 = vmatpush2.bf16.msra.mxu0 0
    %89 = vmatprep.subr.bf16.mxu0 0
    %90 = vmatpush2.bf16.msra.mxu0 0
    %91 = vmatprep.subr.bf16.mxu0 0
    %92 = vmatpush2.bf16.msra.mxu0 0
    %93 = vmatprep.subr.bf16.mxu0 0
    %94 = vmatpush2.bf16.msra.mxu0 0
    %95 = vmatprep.subr.bf16.mxu0 0
    %96 = vmatpush2.bf16.msra.mxu0 0
    %97 = vmatprep.subr.bf16.mxu0 0
    %98 = vmatpush2.bf16.msra.mxu0 0
    %99 = vmatprep.subr.bf16.mxu0 0
    %100 = vmatpush2.bf16.msra.mxu0 0
    %101 = vmatprep.subr.bf16.mxu0 0
    %102 = vmatpush2.bf16.msra.mxu0 0
    %103 = vmatprep.mubr.bf16.mxu0 0
    %104 = vmatmul.mubr.bf16.gmra.mxu0 %v69
    %v105 = vpop.f32.mrf.mxu0
    %v106 = vadd.f32 %v60, %v105
    %v107 = vpop.f32.mrf.mxu0
    %v108 = vpop.f32.mrf.mxu0
    %v109 = vpop.f32.mrf.mxu0
    %110 = vdwg.mxu0
    %v111 = vmax.f32 %v106, 0.0
    %s112 = scalar_lea.vmem [#allocation5], 64
    %v113 = vld [vmem:[%s112] sm:$0xf]
    %v114 = vld [vmem:[%s112 + $0x4] sm:$0xf]
    %v115 = vld [vmem:[%s112 + $0x8] sm:$0xf]
    %v116 = vld [vmem:[%s112 + $0xc] sm:$0xf]
    %v117 = vld [vmem:[%s112 + $0x10] sm:$0xf]
    %v118 = vld [vmem:[%s112 + $0x14] sm:$0xf]
    %v119 = vld [vmem:[%s112 + $0x18] sm:$0xf]
    %v120 = vld [vmem:[%s112 + $0x1c] sm:$0xf]
    %v121 = vld [vmem:[%s112 + $0x20] sm:$0xf]
    %v122 = vld [vmem:[%s112 + $0x24] sm:$0xf]
    %v123 = vld [vmem:[%s112 + $0x28] sm:$0xf]
    %v124 = vld [vmem:[%s112 + $0x2c] sm:$0xf]
    %v125 = vld [vmem:[%s112 + $0x30] sm:$0xf]
    %v126 = vld [vmem:[%s112 + $0x34] sm:$0xf]
    %v127 = vld [vmem:[%s112 + $0x38] sm:$0xf]
    %v128 = vld [vmem:[%s112 + $0x3c] sm:$0xf]
    %v129 = vpack.c.bf16 %v111, %v111
    %v130 = vld [vmem:[#allocation7 + $0x1] sm:$0x1]
    %v131 = vlaneseq
    %v132 = vshrl.u32 %v131, 7
    %v133 = vsub.s32 0, %v132
    %v134 = vrot.slane %v130, %v133
    %v151 = vunpack.c.l.b16 %v113
    %v152 = vunpack.c.l.b16 %v114
    %v153 = vunpack.c.l.b16 %v115
    %v154 = vunpack.c.l.b16 %v116
    %v155 = vunpack.c.l.b16 %v117
    %v156 = vunpack.c.l.b16 %v118
    %v157 = vunpack.c.l.b16 %v119
    %v158 = vunpack.c.l.b16 %v120
    %v159 = vunpack.c.l.b16 %v121
    %v160 = vunpack.c.l.b16 %v122
    %v161 = vunpack.c.l.b16 %v123
    %v162 = vunpack.c.l.b16 %v124
    %v163 = vunpack.c.l.b16 %v125
    %v164 = vunpack.c.l.b16 %v126
    %v165 = vunpack.c.l.b16 %v127
    %v166 = vunpack.c.l.b16 %v128
    %v167 = vpack.c.b16 %v152, %v151
    %v168 = vpack.c.b16 %v154, %v153
    %v169 = vpack.c.b16 %v156, %v155
    %v170 = vpack.c.b16 %v158, %v157
    %v171 = vpack.c.b16 %v160, %v159
    %v172 = vpack.c.b16 %v162, %v161
    %v173 = vpack.c.b16 %v164, %v163
    %v174 = vpack.c.b16 %v166, %v165
    %183 = vmatprep.subr.bf16.mxu0 0
    %184 = vmatpush1.bf16.msra.mxu0 %v174
    %185 = vmatprep.subr.bf16.mxu0 0
    %186 = vmatpush1.bf16.msra.mxu0 %v173
    %187 = vmatprep.subr.bf16.mxu0 0
    %188 = vmatpush1.bf16.msra.mxu0 %v172
    %189 = vmatprep.subr.bf16.mxu0 0
    %190 = vmatpush1.bf16.msra.mxu0 %v171
    %191 = vmatprep.subr.bf16.mxu0 0
    %192 = vmatpush1.bf16.msra.mxu0 %v170
    %193 = vmatprep.subr.bf16.mxu0 0
    %194 = vmatpush1.bf16.msra.mxu0 %v169
    %195 = vmatprep.subr.bf16.mxu0 0
    %196 = vmatpush1.bf16.msra.mxu0 %v168
    %197 = vmatprep.subr.bf16.mxu0 0
    %198 = vmatpush1.bf16.msra.mxu0 %v167
    %199 = vmatprep.subr.bf16.mxu0 0
    %200 = vmatpush2.bf16.msra.mxu0 0
    %201 = vmatprep.subr.bf16.mxu0 0
    %202 = vmatpush2.bf16.msra.mxu0 0
    %203 = vmatprep.subr.bf16.mxu0 0
    %204 = vmatpush2.bf16.msra.mxu0 0
    %205 = vmatprep.subr.bf16.mxu0 0
    %206 = vmatpush2.bf16.msra.mxu0 0
    %207 = vmatprep.subr.bf16.mxu0 0
    %208 = vmatpush2.bf16.msra.mxu0 0
    %209 = vmatprep.subr.bf16.mxu0 0
    %210 = vmatpush2.bf16.msra.mxu0 0
    %211 = vmatprep.subr.bf16.mxu0 0
    %212 = vmatpush2.bf16.msra.mxu0 0
    %213 = vmatprep.subr.bf16.mxu0 0
    %214 = vmatpush2.bf16.msra.mxu0 0
    %215 = vmatprep.mubr.bf16.mxu0 0
    %216 = vmatmul.mubr.bf16.gmra.mxu0 %v129
    %v217 = vpop.f32.mrf.mxu0
    %v218 = vadd.f32 %v134, %v217
    %v219 = vpop.f32.mrf.mxu0
    %v220 = vpop.f32.mrf.mxu0
    %v221 = vpop.f32.mrf.mxu0
    %222 = vdwg.mxu0
    %v223 = vmax.f32 %v218, 0.0
    %s224 = scalar_lea.vmem [#allocation5], 128
    %v225 = vld [vmem:[%s224] sm:$0xf]
    %v226 = vld [vmem:[%s224 + $0x4] sm:$0xf]
    %v227 = vld [vmem:[%s224 + $0x8] sm:$0xf]
    %v228 = vld [vmem:[%s224 + $0xc] sm:$0xf]
    %v229 = vld [vmem:[%s224 + $0x10] sm:$0xf]
    %v230 = vld [vmem:[%s224 + $0x14] sm:$0xf]
    %v231 = vld [vmem:[%s224 + $0x18] sm:$0xf]
    %v232 = vld [vmem:[%s224 + $0x1c] sm:$0xf]
    %v233 = vld [vmem:[%s224 + $0x20] sm:$0xf]
    %v234 = vld [vmem:[%s224 + $0x24] sm:$0xf]
    %v235 = vld [vmem:[%s224 + $0x28] sm:$0xf]
    %v236 = vld [vmem:[%s224 + $0x2c] sm:$0xf]
    %v237 = vld [vmem:[%s224 + $0x30] sm:$0xf]
    %v238 = vld [vmem:[%s224 + $0x34] sm:$0xf]
    %v239 = vld [vmem:[%s224 + $0x38] sm:$0xf]
    %v240 = vld [vmem:[%s224 + $0x3c] sm:$0xf]
    %v241 = vpack.c.bf16 %v223, %v223
    %v242 = vld [vmem:[#allocation7 + $0x2] sm:$0x1]
    %v243 = vlaneseq
    %v244 = vshrl.u32 %v243, 7
    %v245 = vsub.s32 0, %v244
    %v246 = vrot.slane %v242, %v245
    %v263 = vunpack.c.l.b16 %v225
    %v264 = vunpack.c.l.b16 %v226
    %v265 = vunpack.c.l.b16 %v227
    %v266 = vunpack.c.l.b16 %v228
    %v267 = vunpack.c.l.b16 %v229
    %v268 = vunpack.c.l.b16 %v230
    %v269 = vunpack.c.l.b16 %v231
    %v270 = vunpack.c.l.b16 %v232
    %v271 = vunpack.c.l.b16 %v233
    %v272 = vunpack.c.l.b16 %v234
    %v273 = vunpack.c.l.b16 %v235
    %v274 = vunpack.c.l.b16 %v236
    %v275 = vunpack.c.l.b16 %v237
    %v276 = vunpack.c.l.b16 %v238
    %v277 = vunpack.c.l.b16 %v239
    %v278 = vunpack.c.l.b16 %v240
    %v279 = vpack.c.b16 %v264, %v263
    %v280 = vpack.c.b16 %v266, %v265
    %v281 = vpack.c.b16 %v268, %v267
    %v282 = vpack.c.b16 %v270, %v269
    %v283 = vpack.c.b16 %v272, %v271
    %v284 = vpack.c.b16 %v274, %v273
    %v285 = vpack.c.b16 %v276, %v275
    %v286 = vpack.c.b16 %v278, %v277
    %295 = vmatprep.subr.bf16.mxu0 0
    %296 = vmatpush1.bf16.msra.mxu0 %v286
    %297 = vmatprep.subr.bf16.mxu0 0
    %298 = vmatpush1.bf16.msra.mxu0 %v285
    %299 = vmatprep.subr.bf16.mxu0 0
    %300 = vmatpush1.bf16.msra.mxu0 %v284
    %301 = vmatprep.subr.bf16.mxu0 0
    %302 = vmatpush1.bf16.msra.mxu0 %v283
    %303 = vmatprep.subr.bf16.mxu0 0
    %304 = vmatpush1.bf16.msra.mxu0 %v282
    %305 = vmatprep.subr.bf16.mxu0 0
    %306 = vmatpush1.bf16.msra.mxu0 %v281
    %307 = vmatprep.subr.bf16.mxu0 0
    %308 = vmatpush1.bf16.msra.mxu0 %v280
    %309 = vmatprep.subr.bf16.mxu0 0
    %310 = vmatpush1.bf16.msra.mxu0 %v279
    %311 = vmatprep.subr.bf16.mxu0 0
    %312 = vmatpush2.bf16.msra.mxu0 0
    %313 = vmatprep.subr.bf16.mxu0 0
    %314 = vmatpush2.bf16.msra.mxu0 0
    %315 = vmatprep.subr.bf16.mxu0 0
    %316 = vmatpush2.bf16.msra.mxu0 0
    %317 = vmatprep.subr.bf16.mxu0 0
    %318 = vmatpush2.bf16.msra.mxu0 0
    %319 = vmatprep.subr.bf16.mxu0 0
    %320 = vmatpush2.bf16.msra.mxu0 0
    %321 = vmatprep.subr.bf16.mxu0 0
    %322 = vmatpush2.bf16.msra.mxu0 0
    %323 = vmatprep.subr.bf16.mxu0 0
    %324 = vmatpush2.bf16.msra.mxu0 0
    %325 = vmatprep.subr.bf16.mxu0 0
    %326 = vmatpush2.bf16.msra.mxu0 0
    %327 = vmatprep.mubr.bf16.mxu0 0
    %328 = vmatmul.mubr.bf16.gmra.mxu0 %v241
    %v329 = vpop.f32.mrf.mxu0
    %v330 = vadd.f32 %v246, %v329
    %v331 = vpop.f32.mrf.mxu0
    %v332 = vpop.f32.mrf.mxu0
    %v333 = vpop.f32.mrf.mxu0
    %334 = vdwg.mxu0
    %v335 = vmax.f32 %v330, 0.0
    %s336 = scalar_lea.vmem [#allocation5], 192
    %v337 = vld [vmem:[%s336] sm:$0xf]
    %v338 = vld [vmem:[%s336 + $0x4] sm:$0xf]
    %v339 = vld [vmem:[%s336 + $0x8] sm:$0xf]
    %v340 = vld [vmem:[%s336 + $0xc] sm:$0xf]
    %v341 = vld [vmem:[%s336 + $0x10] sm:$0xf]
    %v342 = vld [vmem:[%s336 + $0x14] sm:$0xf]
    %v343 = vld [vmem:[%s336 + $0x18] sm:$0xf]
    %v344 = vld [vmem:[%s336 + $0x1c] sm:$0xf]
    %v345 = vld [vmem:[%s336 + $0x20] sm:$0xf]
    %v346 = vld [vmem:[%s336 + $0x24] sm:$0xf]
    %v347 = vld [vmem:[%s336 + $0x28] sm:$0xf]
    %v348 = vld [vmem:[%s336 + $0x2c] sm:$0xf]
    %v349 = vld [vmem:[%s336 + $0x30] sm:$0xf]
    %v350 = vld [vmem:[%s336 + $0x34] sm:$0xf]
    %v351 = vld [vmem:[%s336 + $0x38] sm:$0xf]
    %v352 = vld [vmem:[%s336 + $0x3c] sm:$0xf]
    %v353 = vpack.c.bf16 %v335, %v335
    %v354 = vld [vmem:[#allocation7 + $0x3] sm:$0x1]
    %v355 = vlaneseq
    %v356 = vshrl.u32 %v355, 7
    %v357 = vsub.s32 0, %v356
    %v358 = vrot.slane %v354, %v357
    %v375 = vunpack.c.l.b16 %v337
    %v376 = vunpack.c.l.b16 %v338
    %v377 = vunpack.c.l.b16 %v339
    %v378 = vunpack.c.l.b16 %v340
    %v379 = vunpack.c.l.b16 %v341
    %v380 = vunpack.c.l.b16 %v342
    %v381 = vunpack.c.l.b16 %v343
    %v382 = vunpack.c.l.b16 %v344
    %v383 = vunpack.c.l.b16 %v345
    %v384 = vunpack.c.l.b16 %v346
    %v385 = vunpack.c.l.b16 %v347
    %v386 = vunpack.c.l.b16 %v348
    %v387 = vunpack.c.l.b16 %v349
    %v388 = vunpack.c.l.b16 %v350
    %v389 = vunpack.c.l.b16 %v351
    %v390 = vunpack.c.l.b16 %v352
    %v391 = vpack.c.b16 %v376, %v375
    %v392 = vpack.c.b16 %v378, %v377
    %v393 = vpack.c.b16 %v380, %v379
    %v394 = vpack.c.b16 %v382, %v381
    %v395 = vpack.c.b16 %v384, %v383
    %v396 = vpack.c.b16 %v386, %v385
    %v397 = vpack.c.b16 %v388, %v387
    %v398 = vpack.c.b16 %v390, %v389
    %407 = vmatprep.subr.bf16.mxu0 0
    %408 = vmatpush1.bf16.msra.mxu0 %v398
    %409 = vmatprep.subr.bf16.mxu0 0
    %410 = vmatpush1.bf16.msra.mxu0 %v397
    %411 = vmatprep.subr.bf16.mxu0 0
    %412 = vmatpush1.bf16.msra.mxu0 %v396
    %413 = vmatprep.subr.bf16.mxu0 0
    %414 = vmatpush1.bf16.msra.mxu0 %v395
    %415 = vmatprep.subr.bf16.mxu0 0
    %416 = vmatpush1.bf16.msra.mxu0 %v394
    %417 = vmatprep.subr.bf16.mxu0 0
    %418 = vmatpush1.bf16.msra.mxu0 %v393
    %419 = vmatprep.subr.bf16.mxu0 0
    %420 = vmatpush1.bf16.msra.mxu0 %v392
    %421 = vmatprep.subr.bf16.mxu0 0
    %422 = vmatpush1.bf16.msra.mxu0 %v391
    %423 = vmatprep.subr.bf16.mxu0 0
    %424 = vmatpush2.bf16.msra.mxu0 0
    %425 = vmatprep.subr.bf16.mxu0 0
    %426 = vmatpush2.bf16.msra.mxu0 0
    %427 = vmatprep.subr.bf16.mxu0 0
    %428 = vmatpush2.bf16.msra.mxu0 0
    %429 = vmatprep.subr.bf16.mxu0 0
    %430 = vmatpush2.bf16.msra.mxu0 0
    %431 = vmatprep.subr.bf16.mxu0 0
    %432 = vmatpush2.bf16.msra.mxu0 0
    %433 = vmatprep.subr.bf16.mxu0 0
    %434 = vmatpush2.bf16.msra.mxu0 0
    %435 = vmatprep.subr.bf16.mxu0 0
    %436 = vmatpush2.bf16.msra.mxu0 0
    %437 = vmatprep.subr.bf16.mxu0 0
    %438 = vmatpush2.bf16.msra.mxu0 0
    %439 = vmatprep.mubr.bf16.mxu0 0
    %440 = vmatmul.mubr.bf16.gmra.mxu0 %v353
    %v441 = vpop.f32.mrf.mxu0
    %v442 = vadd.f32 %v358, %v441
    %v443 = vpop.f32.mrf.mxu0
    %v444 = vpop.f32.mrf.mxu0
    %v445 = vpop.f32.mrf.mxu0
    %446 = vdwg.mxu0
    %v447 = vmax.f32 %v442, 0.0
    %s448 = scalar_lea.vmem [#allocation5], 256
    %v449 = vld [vmem:[%s448] sm:$0xf]
    %v450 = vld [vmem:[%s448 + $0x4] sm:$0xf]
    %v451 = vld [vmem:[%s448 + $0x8] sm:$0xf]
    %v452 = vld [vmem:[%s448 + $0xc] sm:$0xf]
    %v453 = vld [vmem:[%s448 + $0x10] sm:$0xf]
    %v454 = vld [vmem:[%s448 + $0x14] sm:$0xf]
    %v455 = vld [vmem:[%s448 + $0x18] sm:$0xf]
    %v456 = vld [vmem:[%s448 + $0x1c] sm:$0xf]
    %v457 = vld [vmem:[%s448 + $0x20] sm:$0xf]
    %v458 = vld [vmem:[%s448 + $0x24] sm:$0xf]
    %v459 = vld [vmem:[%s448 + $0x28] sm:$0xf]
    %v460 = vld [vmem:[%s448 + $0x2c] sm:$0xf]
    %v461 = vld [vmem:[%s448 + $0x30] sm:$0xf]
    %v462 = vld [vmem:[%s448 + $0x34] sm:$0xf]
    %v463 = vld [vmem:[%s448 + $0x38] sm:$0xf]
    %v464 = vld [vmem:[%s448 + $0x3c] sm:$0xf]
    %v465 = vpack.c.bf16 %v447, %v447
    %v466 = vld [vmem:[#allocation7 + $0x4] sm:$0x1]
    %v467 = vlaneseq
    %v468 = vshrl.u32 %v467, 7
    %v469 = vsub.s32 0, %v468
    %v470 = vrot.slane %v466, %v469
    %v487 = vunpack.c.l.b16 %v449
    %v488 = vunpack.c.l.b16 %v450
    %v489 = vunpack.c.l.b16 %v451
    %v490 = vunpack.c.l.b16 %v452
    %v491 = vunpack.c.l.b16 %v453
    %v492 = vunpack.c.l.b16 %v454
    %v493 = vunpack.c.l.b16 %v455
    %v494 = vunpack.c.l.b16 %v456
    %v495 = vunpack.c.l.b16 %v457
    %v496 = vunpack.c.l.b16 %v458
    %v497 = vunpack.c.l.b16 %v459
    %v498 = vunpack.c.l.b16 %v460
    %v499 = vunpack.c.l.b16 %v461
    %v500 = vunpack.c.l.b16 %v462
    %v501 = vunpack.c.l.b16 %v463
    %v502 = vunpack.c.l.b16 %v464
    %v503 = vpack.c.b16 %v488, %v487
    %v504 = vpack.c.b16 %v490, %v489
    %v505 = vpack.c.b16 %v492, %v491
    %v506 = vpack.c.b16 %v494, %v493
    %v507 = vpack.c.b16 %v496, %v495
    %v508 = vpack.c.b16 %v498, %v497
    %v509 = vpack.c.b16 %v500, %v499
    %v510 = vpack.c.b16 %v502, %v501
    %519 = vmatprep.subr.bf16.mxu0 0
    %520 = vmatpush1.bf16.msra.mxu0 %v510
    %521 = vmatprep.subr.bf16.mxu0 0
    %522 = vmatpush1.bf16.msra.mxu0 %v509
    %523 = vmatprep.subr.bf16.mxu0 0
    %524 = vmatpush1.bf16.msra.mxu0 %v508
    %525 = vmatprep.subr.bf16.mxu0 0
    %526 = vmatpush1.bf16.msra.mxu0 %v507
    %527 = vmatprep.subr.bf16.mxu0 0
    %528 = vmatpush1.bf16.msra.mxu0 %v506
    %529 = vmatprep.subr.bf16.mxu0 0
    %530 = vmatpush1.bf16.msra.mxu0 %v505
    %531 = vmatprep.subr.bf16.mxu0 0
    %532 = vmatpush1.bf16.msra.mxu0 %v504
    %533 = vmatprep.subr.bf16.mxu0 0
    %534 = vmatpush1.bf16.msra.mxu0 %v503
    %535 = vmatprep.subr.bf16.mxu0 0
    %536 = vmatpush2.bf16.msra.mxu0 0
    %537 = vmatprep.subr.bf16.mxu0 0
    %538 = vmatpush2.bf16.msra.mxu0 0
    %539 = vmatprep.subr.bf16.mxu0 0
    %540 = vmatpush2.bf16.msra.mxu0 0
    %541 = vmatprep.subr.bf16.mxu0 0
    %542 = vmatpush2.bf16.msra.mxu0 0
    %543 = vmatprep.subr.bf16.mxu0 0
    %544 = vmatpush2.bf16.msra.mxu0 0
    %545 = vmatprep.subr.bf16.mxu0 0
    %546 = vmatpush2.bf16.msra.mxu0 0
    %547 = vmatprep.subr.bf16.mxu0 0
    %548 = vmatpush2.bf16.msra.mxu0 0
    %549 = vmatprep.subr.bf16.mxu0 0
    %550 = vmatpush2.bf16.msra.mxu0 0
    %551 = vmatprep.mubr.bf16.mxu0 0
    %552 = vmatmul.mubr.bf16.gmra.mxu0 %v465
    %v553 = vpop.f32.mrf.mxu0
    %v554 = vadd.f32 %v470, %v553
    %v555 = vpop.f32.mrf.mxu0
    %v556 = vpop.f32.mrf.mxu0
    %v557 = vpop.f32.mrf.mxu0
    %558 = vdwg.mxu0
    %v559 = vmax.f32 %v554, 0.0
    %s560 = scalar_lea.vmem [#allocation5], 320
    %v561 = vld [vmem:[%s560] sm:$0xf]
    %v562 = vld [vmem:[%s560 + $0x4] sm:$0xf]
    %v563 = vld [vmem:[%s560 + $0x8] sm:$0xf]
    %v564 = vld [vmem:[%s560 + $0xc] sm:$0xf]
    %v565 = vld [vmem:[%s560 + $0x10] sm:$0xf]
    %v566 = vld [vmem:[%s560 + $0x14] sm:$0xf]
    %v567 = vld [vmem:[%s560 + $0x18] sm:$0xf]
    %v568 = vld [vmem:[%s560 + $0x1c] sm:$0xf]
    %v569 = vld [vmem:[%s560 + $0x20] sm:$0xf]
    %v570 = vld [vmem:[%s560 + $0x24] sm:$0xf]
    %v571 = vld [vmem:[%s560 + $0x28] sm:$0xf]
    %v572 = vld [vmem:[%s560 + $0x2c] sm:$0xf]
    %v573 = vld [vmem:[%s560 + $0x30] sm:$0xf]
    %v574 = vld [vmem:[%s560 + $0x34] sm:$0xf]
    %v575 = vld [vmem:[%s560 + $0x38] sm:$0xf]
    %v576 = vld [vmem:[%s560 + $0x3c] sm:$0xf]
    %v577 = vpack.c.bf16 %v559, %v559
    %v578 = vld [vmem:[#allocation7 + $0x5] sm:$0x1]
    %v579 = vlaneseq
    %v580 = vshrl.u32 %v579, 7
    %v581 = vsub.s32 0, %v580
    %v582 = vrot.slane %v578, %v581
    %v599 = vunpack.c.l.b16 %v561
    %v600 = vunpack.c.l.b16 %v562
    %v601 = vunpack.c.l.b16 %v563
    %v602 = vunpack.c.l.b16 %v564
    %v603 = vunpack.c.l.b16 %v565
    %v604 = vunpack.c.l.b16 %v566
    %v605 = vunpack.c.l.b16 %v567
    %v606 = vunpack.c.l.b16 %v568
    %v607 = vunpack.c.l.b16 %v569
    %v608 = vunpack.c.l.b16 %v570
    %v609 = vunpack.c.l.b16 %v571
    %v610 = vunpack.c.l.b16 %v572
    %v611 = vunpack.c.l.b16 %v573
    %v612 = vunpack.c.l.b16 %v574
    %v613 = vunpack.c.l.b16 %v575
    %v614 = vunpack.c.l.b16 %v576
    %v615 = vpack.c.b16 %v600, %v599
    %v616 = vpack.c.b16 %v602, %v601
    %v617 = vpack.c.b16 %v604, %v603
    %v618 = vpack.c.b16 %v606, %v605
    %v619 = vpack.c.b16 %v608, %v607
    %v620 = vpack.c.b16 %v610, %v609
    %v621 = vpack.c.b16 %v612, %v611
    %v622 = vpack.c.b16 %v614, %v613
    %631 = vmatprep.subr.bf16.mxu0 0
    %632 = vmatpush1.bf16.msra.mxu0 %v622
    %633 = vmatprep.subr.bf16.mxu0 0
    %634 = vmatpush1.bf16.msra.mxu0 %v621
    %635 = vmatprep.subr.bf16.mxu0 0
    %636 = vmatpush1.bf16.msra.mxu0 %v620
    %637 = vmatprep.subr.bf16.mxu0 0
    %638 = vmatpush1.bf16.msra.mxu0 %v619
    %639 = vmatprep.subr.bf16.mxu0 0
    %640 = vmatpush1.bf16.msra.mxu0 %v618
    %641 = vmatprep.subr.bf16.mxu0 0
    %642 = vmatpush1.bf16.msra.mxu0 %v617
    %643 = vmatprep.subr.bf16.mxu0 0
    %644 = vmatpush1.bf16.msra.mxu0 %v616
    %645 = vmatprep.subr.bf16.mxu0 0
    %646 = vmatpush1.bf16.msra.mxu0 %v615
    %647 = vmatprep.subr.bf16.mxu0 0
    %648 = vmatpush2.bf16.msra.mxu0 0
    %649 = vmatprep.subr.bf16.mxu0 0
    %650 = vmatpush2.bf16.msra.mxu0 0
    %651 = vmatprep.subr.bf16.mxu0 0
    %652 = vmatpush2.bf16.msra.mxu0 0
    %653 = vmatprep.subr.bf16.mxu0 0
    %654 = vmatpush2.bf16.msra.mxu0 0
    %655 = vmatprep.subr.bf16.mxu0 0
    %656 = vmatpush2.bf16.msra.mxu0 0
    %657 = vmatprep.subr.bf16.mxu0 0
    %658 = vmatpush2.bf16.msra.mxu0 0
    %659 = vmatprep.subr.bf16.mxu0 0
    %660 = vmatpush2.bf16.msra.mxu0 0
    %661 = vmatprep.subr.bf16.mxu0 0
    %662 = vmatpush2.bf16.msra.mxu0 0
    %663 = vmatprep.mubr.bf16.mxu0 0
    %664 = vmatmul.mubr.bf16.gmra.mxu0 %v577
    %v665 = vpop.f32.mrf.mxu0
    %v666 = vadd.f32 %v582, %v665
    %v667 = vpop.f32.mrf.mxu0
    %v668 = vpop.f32.mrf.mxu0
    %v669 = vpop.f32.mrf.mxu0
    %670 = vdwg.mxu0
    %v671 = vmax.f32 %v666, 0.0
    %s672 = scalar_lea.vmem [#allocation5], 384
    %v673 = vld [vmem:[%s672] sm:$0xf]
    %v674 = vld [vmem:[%s672 + $0x4] sm:$0xf]
    %v675 = vld [vmem:[%s672 + $0x8] sm:$0xf]
    %v676 = vld [vmem:[%s672 + $0xc] sm:$0xf]
    %v677 = vld [vmem:[%s672 + $0x10] sm:$0xf]
    %v678 = vld [vmem:[%s672 + $0x14] sm:$0xf]
    %v679 = vld [vmem:[%s672 + $0x18] sm:$0xf]
    %v680 = vld [vmem:[%s672 + $0x1c] sm:$0xf]
    %v681 = vld [vmem:[%s672 + $0x20] sm:$0xf]
    %v682 = vld [vmem:[%s672 + $0x24] sm:$0xf]
    %v683 = vld [vmem:[%s672 + $0x28] sm:$0xf]
    %v684 = vld [vmem:[%s672 + $0x2c] sm:$0xf]
    %v685 = vld [vmem:[%s672 + $0x30] sm:$0xf]
    %v686 = vld [vmem:[%s672 + $0x34] sm:$0xf]
    %v687 = vld [vmem:[%s672 + $0x38] sm:$0xf]
    %v688 = vld [vmem:[%s672 + $0x3c] sm:$0xf]
    %v689 = vpack.c.bf16 %v671, %v671
    %v690 = vld [vmem:[#allocation7 + $0x6] sm:$0x1]
    %v691 = vlaneseq
    %v692 = vshrl.u32 %v691, 7
    %v693 = vsub.s32 0, %v692
    %v694 = vrot.slane %v690, %v693
    %v711 = vunpack.c.l.b16 %v673
    %v712 = vunpack.c.l.b16 %v674
    %v713 = vunpack.c.l.b16 %v675
    %v714 = vunpack.c.l.b16 %v676
    %v715 = vunpack.c.l.b16 %v677
    %v716 = vunpack.c.l.b16 %v678
    %v717 = vunpack.c.l.b16 %v679
    %v718 = vunpack.c.l.b16 %v680
    %v719 = vunpack.c.l.b16 %v681
    %v720 = vunpack.c.l.b16 %v682
    %v721 = vunpack.c.l.b16 %v683
    %v722 = vunpack.c.l.b16 %v684
    %v723 = vunpack.c.l.b16 %v685
    %v724 = vunpack.c.l.b16 %v686
    %v725 = vunpack.c.l.b16 %v687
    %v726 = vunpack.c.l.b16 %v688
    %v727 = vpack.c.b16 %v712, %v711
    %v728 = vpack.c.b16 %v714, %v713
    %v729 = vpack.c.b16 %v716, %v715
    %v730 = vpack.c.b16 %v718, %v717
    %v731 = vpack.c.b16 %v720, %v719
    %v732 = vpack.c.b16 %v722, %v721
    %v733 = vpack.c.b16 %v724, %v723
    %v734 = vpack.c.b16 %v726, %v725
    %743 = vmatprep.subr.bf16.mxu0 0
    %744 = vmatpush1.bf16.msra.mxu0 %v734
    %745 = vmatprep.subr.bf16.mxu0 0
    %746 = vmatpush1.bf16.msra.mxu0 %v733
    %747 = vmatprep.subr.bf16.mxu0 0
    %748 = vmatpush1.bf16.msra.mxu0 %v732
    %749 = vmatprep.subr.bf16.mxu0 0
    %750 = vmatpush1.bf16.msra.mxu0 %v731
    %751 = vmatprep.subr.bf16.mxu0 0
    %752 = vmatpush1.bf16.msra.mxu0 %v730
    %753 = vmatprep.subr.bf16.mxu0 0
    %754 = vmatpush1.bf16.msra.mxu0 %v729
    %755 = vmatprep.subr.bf16.mxu0 0
    %756 = vmatpush1.bf16.msra.mxu0 %v728
    %757 = vmatprep.subr.bf16.mxu0 0
    %758 = vmatpush1.bf16.msra.mxu0 %v727
    %759 = vmatprep.subr.bf16.mxu0 0
    %760 = vmatpush2.bf16.msra.mxu0 0
    %761 = vmatprep.subr.bf16.mxu0 0
    %762 = vmatpush2.bf16.msra.mxu0 0
    %763 = vmatprep.subr.bf16.mxu0 0
    %764 = vmatpush2.bf16.msra.mxu0 0
    %765 = vmatprep.subr.bf16.mxu0 0
    %766 = vmatpush2.bf16.msra.mxu0 0
    %767 = vmatprep.subr.bf16.mxu0 0
    %768 = vmatpush2.bf16.msra.mxu0 0
    %769 = vmatprep.subr.bf16.mxu0 0
    %770 = vmatpush2.bf16.msra.mxu0 0
    %771 = vmatprep.subr.bf16.mxu0 0
    %772 = vmatpush2.bf16.msra.mxu0 0
    %773 = vmatprep.subr.bf16.mxu0 0
    %774 = vmatpush2.bf16.msra.mxu0 0
    %775 = vmatprep.mubr.bf16.mxu0 0
    %776 = vmatmul.mubr.bf16.gmra.mxu0 %v689
    %v777 = vpop.f32.mrf.mxu0
    %v778 = vadd.f32 %v694, %v777
    %v779 = vpop.f32.mrf.mxu0
    %v780 = vpop.f32.mrf.mxu0
    %v781 = vpop.f32.mrf.mxu0
    %782 = vdwg.mxu0
    %v783 = vmax.f32 %v778, 0.0
    %s784 = scalar_lea.vmem [#allocation5], 448
    %v785 = vld [vmem:[%s784] sm:$0xf]
    %v786 = vld [vmem:[%s784 + $0x4] sm:$0xf]
    %v787 = vld [vmem:[%s784 + $0x8] sm:$0xf]
    %v788 = vld [vmem:[%s784 + $0xc] sm:$0xf]
    %v789 = vld [vmem:[%s784 + $0x10] sm:$0xf]
    %v790 = vld [vmem:[%s784 + $0x14] sm:$0xf]
    %v791 = vld [vmem:[%s784 + $0x18] sm:$0xf]
    %v792 = vld [vmem:[%s784 + $0x1c] sm:$0xf]
    %v793 = vld [vmem:[%s784 + $0x20] sm:$0xf]
    %v794 = vld [vmem:[%s784 + $0x24] sm:$0xf]
    %v795 = vld [vmem:[%s784 + $0x28] sm:$0xf]
    %v796 = vld [vmem:[%s784 + $0x2c] sm:$0xf]
    %v797 = vld [vmem:[%s784 + $0x30] sm:$0xf]
    %v798 = vld [vmem:[%s784 + $0x34] sm:$0xf]
    %v799 = vld [vmem:[%s784 + $0x38] sm:$0xf]
    %v800 = vld [vmem:[%s784 + $0x3c] sm:$0xf]
    %v801 = vpack.c.bf16 %v783, %v783
    %v802 = vld [vmem:[#allocation7 + $0x7] sm:$0x1]
    %v803 = vlaneseq
    %v804 = vshrl.u32 %v803, 7
    %v805 = vsub.s32 0, %v804
    %v806 = vrot.slane %v802, %v805
    %v823 = vunpack.c.l.b16 %v785
    %v824 = vunpack.c.l.b16 %v786
    %v825 = vunpack.c.l.b16 %v787
    %v826 = vunpack.c.l.b16 %v788
    %v827 = vunpack.c.l.b16 %v789
    %v828 = vunpack.c.l.b16 %v790
    %v829 = vunpack.c.l.b16 %v791
    %v830 = vunpack.c.l.b16 %v792
    %v831 = vunpack.c.l.b16 %v793
    %v832 = vunpack.c.l.b16 %v794
    %v833 = vunpack.c.l.b16 %v795
    %v834 = vunpack.c.l.b16 %v796
    %v835 = vunpack.c.l.b16 %v797
    %v836 = vunpack.c.l.b16 %v798
    %v837 = vunpack.c.l.b16 %v799
    %v838 = vunpack.c.l.b16 %v800
    %v839 = vpack.c.b16 %v824, %v823
    %v840 = vpack.c.b16 %v826, %v825
    %v841 = vpack.c.b16 %v828, %v827
    %v842 = vpack.c.b16 %v830, %v829
    %v843 = vpack.c.b16 %v832, %v831
    %v844 = vpack.c.b16 %v834, %v833
    %v845 = vpack.c.b16 %v836, %v835
    %v846 = vpack.c.b16 %v838, %v837
    %855 = vmatprep.subr.bf16.mxu0 0
    %856 = vmatpush1.bf16.msra.mxu0 %v846
    %857 = vmatprep.subr.bf16.mxu0 0
    %858 = vmatpush1.bf16.msra.mxu0 %v845
    %859 = vmatprep.subr.bf16.mxu0 0
    %860 = vmatpush1.bf16.msra.mxu0 %v844
    %861 = vmatprep.subr.bf16.mxu0 0
    %862 = vmatpush1.bf16.msra.mxu0 %v843
    %863 = vmatprep.subr.bf16.mxu0 0
    %864 = vmatpush1.bf16.msra.mxu0 %v842
    %865 = vmatprep.subr.bf16.mxu0 0
    %866 = vmatpush1.bf16.msra.mxu0 %v841
    %867 = vmatprep.subr.bf16.mxu0 0
    %868 = vmatpush1.bf16.msra.mxu0 %v840
    %869 = vmatprep.subr.bf16.mxu0 0
    %870 = vmatpush1.bf16.msra.mxu0 %v839
    %871 = vmatprep.subr.bf16.mxu0 0
    %872 = vmatpush2.bf16.msra.mxu0 0
    %873 = vmatprep.subr.bf16.mxu0 0
    %874 = vmatpush2.bf16.msra.mxu0 0
    %875 = vmatprep.subr.bf16.mxu0 0
    %876 = vmatpush2.bf16.msra.mxu0 0
    %877 = vmatprep.subr.bf16.mxu0 0
    %878 = vmatpush2.bf16.msra.mxu0 0
    %879 = vmatprep.subr.bf16.mxu0 0
    %880 = vmatpush2.bf16.msra.mxu0 0
    %881 = vmatprep.subr.bf16.mxu0 0
    %882 = vmatpush2.bf16.msra.mxu0 0
    %883 = vmatprep.subr.bf16.mxu0 0
    %884 = vmatpush2.bf16.msra.mxu0 0
    %885 = vmatprep.subr.bf16.mxu0 0
    %886 = vmatpush2.bf16.msra.mxu0 0
    %887 = vmatprep.mubr.bf16.mxu0 0
    %888 = vmatmul.mubr.bf16.gmra.mxu0 %v801
    %v889 = vpop.f32.mrf.mxu0
    %v890 = vadd.f32 %v806, %v889
    %v891 = vpop.f32.mrf.mxu0
    %v892 = vpop.f32.mrf.mxu0
    %v893 = vpop.f32.mrf.mxu0
    %894 = vdwg.mxu0
    %v895 = vmax.f32 %v890, 0.0
    %v896 = vadd.f32 %v447, %v895
    %897 = vst [vmem:[#allocation8] sm:$0xff] %v896
    // Predicated region
    $region26: #{tpu_custom_call.1} parent=1 // pred_check
      _
    $region27: #{tpu_custom_call.1} parent=1 // pred_check_branch
      %899 = sbr.rel (0) target = $region29
    $region28: #{tpu_custom_call.1} parent=1 // pred_region
      %s901 = ssub.s32 128, 128
      %902 = vsyncadd [#allocation4], %s901
      %s904 = sshll.u32 [#allocation8], 4
      %s905 = int_to_ptr.vmem [resolvable:$true] %s904
      %907 = dma.vmem_to_hbm [thread:$0]  %s905, 128, %s3, [#allocation4]
    $region29: #{tpu_custom_call.1} parent=1 // pred_fallthru
      _
    // Predicated region
    $region30: #{tpu_custom_call.1} parent=1 // pred_check
      _
    $region31: #{tpu_custom_call.1} parent=1 // pred_check_branch
      %909 = sbr.rel (0) target = $region33
    $region32: #{tpu_custom_call.1} parent=1 // pred_region
      %910 = dma.done [#allocation4], 128
    $region33: #{tpu_custom_call.1} parent=1 // pred_fallthru
      _
    %911 = vsyncpa [#allocation3], 1
    %912 = vsyncpa [#allocation6], 1
    %913 = vsyncpa [#allocation4], 1

</llo_original>
